<compile_context>
chip_gen: v7x
topology: tpu7x:2x2x1
jax: 0.10.0
libtpu: 0.0.40
codegen_flags: <defaults>
</compile_context>

<pallas_src>
import functools

import jax
import jax.numpy as jnp
import numpy as np
from jax import lax
from jax.experimental import pallas as pl
from jax.experimental.pallas import tpu as pltpu


def _dense_layer_kernel(scale_ref, shift_ref, x_ref, w_ref, o_ref, pad_ref,
                        *, H, W, C, G, PAD):
    """One grid step == one batch element.

    scale_ref : (C, 1)            gamma / sqrt(var + eps)
    shift_ref : (C, 1)            beta - mean * scale
    x_ref     : (1, C, H*W)       input tile, spatial flattened on the lane axis
    w_ref     : (9, G, C)         conv weight, tap-major (t = kh*3 + kw)
    o_ref     : (1, G + C, H*W)   fused output: conv channels then the raw input
    pad_ref   : (C, H*W + 2*PAD)  VMEM scratch: zero borders, ReLU(BN(x)) interior
    """
    HW = H * W
    x = x_ref[0]                                                    # (C, HW)

    # Fused BatchNorm (affine scale/shift) + ReLU on the VPU.
    y = jnp.maximum(x * scale_ref[...] + shift_ref[...], 0.0)       # (C, HW)

    # Flat zero-padded activation: [PAD zeros | y | PAD zeros].
    # Border zeroing is cheap (2 x (C,128)) and megacore-safe; interior write is
    # lane-aligned (offset PAD = 128).
    pad_ref[:, pl.ds(0, PAD)] = jnp.zeros((C, PAD), jnp.float32)
    pad_ref[:, pl.ds(PAD + HW, PAD)] = jnp.zeros((C, PAD), jnp.float32)
    pad_ref[:, pl.ds(PAD, HW)] = y

    # Column-edge masks (row-wraparound in the flat layout), hoisted out of the
    # unrolled tap loop.
    col = lax.broadcasted_iota(jnp.int32, (C, HW), 1) % W
    keep_l = col >= 1           # valid when reading column w-1 (dw == -1)
    keep_r = col <= W - 2       # valid when reading column w+1 (dw == +1)

    # 3x3 "same" conv as 9 whole-image contractions: (G,C) @ (C,HW) -> (G,HW).
    acc = jnp.zeros((G, HW), jnp.float32)
    for t in range(9):                                 # static, fully unrolled
        dh = t // 3 - 1
        dw = t % 3 - 1
        patch = pad_ref[:, pl.ds(PAD + dh * W + dw, HW)]            # (C, HW)
        if dw == -1:
            patch = jnp.where(keep_l, patch, 0.0)
        elif dw == 1:
            patch = jnp.where(keep_r, patch, 0.0)
        acc = acc + jnp.dot(w_ref[t], patch,
                            preferred_element_type=jnp.float32)

    # Fused torch.cat([conv_out, x], dim=1): lane-dense block stores.
    o_ref[0, pl.ds(0, G), :] = acc.astype(o_ref.dtype)
    o_ref[0, pl.ds(G, C), :] = x.astype(o_ref.dtype)


def dense_layer_forward(x_nchw, gamma, beta, conv_w, eps=1e-5):
    """Pallas implementation of DenseLayer.forward.

    x_nchw : (N, C, H, W) float32
    gamma, beta : (C,) BN affine params
    conv_w : (G, C, 3, 3) conv weight (PyTorch OIHW), no bias
    returns: (N, G + C, H, W) = concat([conv(relu(bn(x))), x], axis=1)
    """
    N, C, H, W = x_nchw.shape
    G = conv_w.shape[0]
    HW = H * W
    PAD = 128
    assert W + 1 <= PAD, "flat padding must cover one image row + 1"

    x = x_nchw.astype(jnp.float32)
    x_flat = x.reshape(N, C, HW)                       # free reshape (contiguous)

    # Training-mode BN batch statistics (biased variance, like PyTorch), folded
    # into one per-channel scale/shift applied inside the kernel.
    mean = jnp.mean(x_flat, axis=(0, 2))
    var = jnp.var(x_flat, axis=(0, 2))
    scale = gamma.astype(jnp.float32) / jnp.sqrt(var + eps)
    shift = beta.astype(jnp.float32) - mean * scale

    # OIHW (G,C,3,3) -> tap-major (9, G, C); tiny one-off rearrangement.
    w9 = jnp.transpose(conv_w.astype(jnp.float32), (2, 3, 0, 1)).reshape(9, G, C)

    kernel = functools.partial(_dense_layer_kernel, H=H, W=W, C=C, G=G, PAD=PAD)

    cost = pl.CostEstimate(
        flops=2 * N * HW * 9 * C * G,
        transcendentals=0,
        bytes_accessed=4 * (N * C * HW + N * (G + C) * HW + 9 * G * C + 2 * C),
    )

    out_flat = pl.pallas_call(
        kernel,
        out_shape=jax.ShapeDtypeStruct((N, G + C, HW), jnp.float32),
        grid_spec=pltpu.PrefetchScalarGridSpec(
            num_scalar_prefetch=0,
            grid=(N,),
            in_specs=[
                pl.BlockSpec((C, 1), lambda n: (0, 0)),           # scale
                pl.BlockSpec((C, 1), lambda n: (0, 0)),           # shift
                pl.BlockSpec((1, C, HW), lambda n: (n, 0, 0)),    # x (flattened)
                pl.BlockSpec((9, G, C), lambda n: (0, 0, 0)),     # weights
            ],
            out_specs=pl.BlockSpec((1, G + C, HW), lambda n: (n, 0, 0)),
            scratch_shapes=[pltpu.VMEM((C, HW + 2 * PAD), jnp.float32)],
        ),
        compiler_params=pltpu.CompilerParams(
            dimension_semantics=("parallel",)),
        cost_estimate=cost,
    )(scale.reshape(C, 1), shift.reshape(C, 1), x_flat, w9)

    return out_flat.reshape(N, G + C, H, W)            # free reshape back to NCHW


def _reference_forward(x_nchw, gamma, beta, conv_w, eps=1e-5):
    """Pure-JAX reference mirroring the PyTorch forward (training-mode BN)."""
    mean = jnp.mean(x_nchw, axis=(0, 2, 3), keepdims=True)
    var = jnp.var(x_nchw, axis=(0, 2, 3), keepdims=True)
    xn = (x_nchw - mean) / jnp.sqrt(var + eps)
    xn = xn * gamma[None, :, None, None] + beta[None, :, None, None]
    act = jnp.maximum(xn, 0.0)
    conv = lax.conv_general_dilated(
        act, conv_w, window_strides=(1, 1), padding="SAME",
        dimension_numbers=("NCHW", "OIHW", "NCHW"))
    return jnp.concatenate([conv, x_nchw], axis=1)


if __name__ == "__main__":
    # Small shapes consistent with DenseLayer(in_channels=4, growth_rate=8).
    N, C, H, W = 2, 4, 16, 16
    G = 8

    key = jax.random.PRNGKey(0)
    kx, kw = jax.random.split(key)
    x = jax.random.normal(kx, (N, C, H, W), dtype=jnp.float32)
    # BN at init: gamma=1, beta=0; small random conv weight (no bias).
    gamma = jnp.ones((C,), jnp.float32)
    beta = jnp.zeros((C,), jnp.float32)
    conv_w = 0.1 * jax.random.normal(kw, (G, C, 3, 3), dtype=jnp.float32)

    out = dense_layer_forward(x, gamma, beta, conv_w)
    out = jax.block_until_ready(out)

    ref = jax.block_until_ready(_reference_forward(x, gamma, beta, conv_w))

    assert out.shape == (N, G + C, H, W), out.shape
    np.testing.assert_allclose(np.asarray(out), np.asarray(ref), atol=1e-4, rtol=1e-4)
    print("KERNEL_OK")
</pallas_src>

<mosaic_0001>
module attributes {stable_mosaic.version = 11 : i64} {
  func.func @_dense_layer_kernel(%arg0: i32, %arg1: memref<4x1xf32, #tpu.memory_space<vmem>>, %arg2: memref<4x1xf32, #tpu.memory_space<vmem>>, %arg3: memref<1x4x256xf32, #tpu.memory_space<vmem>>, %arg4: memref<9x8x4xf32, #tpu.memory_space<vmem>>, %arg5: memref<1x12x256xf32, #tpu.memory_space<vmem>>, %arg6: memref<4x512xf32, #tpu.memory_space<vmem>>) attributes {dimension_semantics = [#tpu.dimension_semantics<parallel>], iteration_bounds = array<i64: 2>, scalar_prefetch = 0 : i64, scratch_operands = 1 : i64, tpu.core_type = #tpu.core_type<tc>, window_params = [{pipeline_mode = #tpu.pipeline_mode<synchronous>, transform_indices = @transform_0, window_bounds = array<i64: 4, 1>}, {pipeline_mode = #tpu.pipeline_mode<synchronous>, transform_indices = @transform_1, window_bounds = array<i64: 4, 1>}, {transform_indices = @transform_2, window_bounds = array<i64: 1, 4, 256>}, {pipeline_mode = #tpu.pipeline_mode<synchronous>, transform_indices = @transform_3, window_bounds = array<i64: 9, 8, 4>}, {transform_indices = @transform_4, window_bounds = array<i64: 1, 12, 256>}]} {
    %c0 = arith.constant 0 : index
    %c0_0 = arith.constant 0 : index
    %c0_1 = arith.constant 0 : index
    %0 = vector.load %arg3[%c0, %c0_0, %c0_1] : memref<1x4x256xf32, #tpu.memory_space<vmem>>, vector<1x4x256xf32>
    %1 = vector.shape_cast %0 : vector<1x4x256xf32> to vector<4x256xf32>
    %c0_2 = arith.constant 0 : index
    %c0_3 = arith.constant 0 : index
    %2 = vector.load %arg1[%c0_2, %c0_3] : memref<4x1xf32, #tpu.memory_space<vmem>>, vector<4x1xf32>
    %3 = vector.broadcast %2 : vector<4x1xf32> to vector<4x256xf32>
    %4 = arith.mulf %1, %3 : vector<4x256xf32>
    %c0_4 = arith.constant 0 : index
    %c0_5 = arith.constant 0 : index
    %5 = vector.load %arg2[%c0_4, %c0_5] : memref<4x1xf32, #tpu.memory_space<vmem>>, vector<4x1xf32>
    %6 = vector.broadcast %5 : vector<4x1xf32> to vector<4x256xf32>
    %7 = arith.addf %4, %6 : vector<4x256xf32>
    %cst = arith.constant 0.000000e+00 : f32
    %8 = vector.broadcast %cst : f32 to vector<4x256xf32>
    %9 = arith.maximumf %7, %8 : vector<4x256xf32>
    %cst_6 = arith.constant 0.000000e+00 : f32
    %10 = vector.broadcast %cst_6 : f32 to vector<4x128xf32>
    %c0_7 = arith.constant 0 : index
    %c0_8 = arith.constant 0 : index
    %11 = vector.load %arg6[%c0_7, %c0_8] : memref<4x512xf32, #tpu.memory_space<vmem>>, vector<4x128xf32>
    tpu.vector_store %arg6[%c0_7, %c0_8], %10 {strides = array<i32>} : memref<4x512xf32, #tpu.memory_space<vmem>>, vector<4x128xf32>,
    %cst_9 = arith.constant 0.000000e+00 : f32
    %12 = vector.broadcast %cst_9 : f32 to vector<4x128xf32>
    %c0_10 = arith.constant 0 : index
    %c384 = arith.constant 384 : index
    %13 = vector.load %arg6[%c0_10, %c384] : memref<4x512xf32, #tpu.memory_space<vmem>>, vector<4x128xf32>
    tpu.vector_store %arg6[%c0_10, %c384], %12 {strides = array<i32>} : memref<4x512xf32, #tpu.memory_space<vmem>>, vector<4x128xf32>,
    %c0_11 = arith.constant 0 : index
    %c128 = arith.constant 128 : index
    %14 = vector.load %arg6[%c0_11, %c128] : memref<4x512xf32, #tpu.memory_space<vmem>>, vector<4x256xf32>
    tpu.vector_store %arg6[%c0_11, %c128], %9 {strides = array<i32>} : memref<4x512xf32, #tpu.memory_space<vmem>>, vector<4x256xf32>,
    %15 = tpu.iota {dimensions = array<i32: 1>} : vector<4x256xi32>
    %c16_i32 = arith.constant 16 : i32
    %c0_i32 = arith.constant 0 : i32
    %16 = arith.cmpi eq, %c16_i32, %c0_i32 : i32
    %c1_i32 = arith.constant 1 : i32
    %17 = arith.select %16, %c1_i32, %c16_i32 : i32
    %18 = vector.broadcast %17 : i32 to vector<4x256xi32>
    %19 = arith.remsi %15, %18 : vector<4x256xi32>
    %c0_i32_12 = arith.constant 0 : i32
    %20 = vector.broadcast %c0_i32_12 : i32 to vector<4x256xi32>
    %21 = arith.cmpi ne, %19, %20 : vector<4x256xi32>
    %c0_i32_13 = arith.constant 0 : i32
    %22 = vector.broadcast %c0_i32_13 : i32 to vector<4x256xi32>
    %23 = arith.cmpi slt, %19, %22 : vector<4x256xi32>
    %c0_i32_14 = arith.constant 0 : i32
    %24 = arith.cmpi slt, %17, %c0_i32_14 : i32
    %25 = vector.broadcast %24 : i1 to vector<4x256xi1>
    %26 = vector.broadcast %25 : vector<4x256xi1> to vector<4x256xi1>
    %27 = arith.xori %23, %26 : vector<4x256xi1>
    %28 = arith.andi %27, %21 : vector<4x256xi1>
    %29 = vector.broadcast %17 : i32 to vector<4x256xi32>
    %30 = arith.addi %19, %29 : vector<4x256xi32>
    %31 = arith.select %28, %30, %19 : vector<4x256xi1>, vector<4x256xi32>
    %c1_i32_15 = arith.constant 1 : i32
    %32 = vector.broadcast %c1_i32_15 : i32 to vector<4x256xi32>
    %33 = arith.cmpi sge, %31, %32 : vector<4x256xi32>
    %c14_i32 = arith.constant 14 : i32
    %34 = vector.broadcast %c14_i32 : i32 to vector<4x256xi32>
    %35 = arith.cmpi sle, %31, %34 : vector<4x256xi32>
    %cst_16 = arith.constant 0.000000e+00 : f32
    %36 = vector.broadcast %cst_16 : f32 to vector<8x256xf32>
    %c0_17 = arith.constant 0 : index
    %c111 = arith.constant 111 : index
    %37 = vector.load %arg6[%c0_17, %c111] : memref<4x512xf32, #tpu.memory_space<vmem>>, vector<4x256xf32>
    %cst_18 = arith.constant 0.000000e+00 : f32
    %38 = vector.broadcast %cst_18 : f32 to vector<4x256xf32>
    %39 = arith.select %33, %37, %38 : vector<4x256xi1>, vector<4x256xf32>
    %c0_19 = arith.constant 0 : index
    %c0_20 = arith.constant 0 : index
    %c0_21 = arith.constant 0 : index
    %40 = vector.load %arg4[%c0_19, %c0_20, %c0_21] : memref<9x8x4xf32, #tpu.memory_space<vmem>>, vector<1x8x4xf32>
    %41 = vector.shape_cast %40 : vector<1x8x4xf32> to vector<8x4xf32>
    %cst_22 = arith.constant dense<0.000000e+00> : vector<8x256xf32>
    %42 = tpu.matmul %41, %39, %cst_22 {dimension_numbers = #tpu.dot_dimension_numbers<[1], [0], [0], [1], [0, 0, 1, 1], [], []>} : vector<8x4xf32>, vector<4x256xf32>, vector<8x256xf32> -> vector<8x256xf32>
    %43 = arith.addf %36, %42 : vector<8x256xf32>
    %c0_23 = arith.constant 0 : index
    %c112 = arith.constant 112 : index
    %44 = vector.load %arg6[%c0_23, %c112] : memref<4x512xf32, #tpu.memory_space<vmem>>, vector<4x256xf32>
    %c1 = arith.constant 1 : index
    %c0_24 = arith.constant 0 : index
    %c0_25 = arith.constant 0 : index
    %45 = vector.load %arg4[%c1, %c0_24, %c0_25] : memref<9x8x4xf32, #tpu.memory_space<vmem>>, vector<1x8x4xf32>
    %46 = vector.shape_cast %45 : vector<1x8x4xf32> to vector<8x4xf32>
    %cst_26 = arith.constant dense<0.000000e+00> : vector<8x256xf32>
    %47 = tpu.matmul %46, %44, %cst_26 {dimension_numbers = #tpu.dot_dimension_numbers<[1], [0], [0], [1], [0, 0, 1, 1], [], []>} : vector<8x4xf32>, vector<4x256xf32>, vector<8x256xf32> -> vector<8x256xf32>
    %48 = arith.addf %43, %47 : vector<8x256xf32>
    %c0_27 = arith.constant 0 : index
    %c113 = arith.constant 113 : index
    %49 = vector.load %arg6[%c0_27, %c113] : memref<4x512xf32, #tpu.memory_space<vmem>>, vector<4x256xf32>
    %cst_28 = arith.constant 0.000000e+00 : f32
    %50 = vector.broadcast %cst_28 : f32 to vector<4x256xf32>
    %51 = arith.select %35, %49, %50 : vector<4x256xi1>, vector<4x256xf32>
    %c2 = arith.constant 2 : index
    %c0_29 = arith.constant 0 : index
    %c0_30 = arith.constant 0 : index
    %52 = vector.load %arg4[%c2, %c0_29, %c0_30] : memref<9x8x4xf32, #tpu.memory_space<vmem>>, vector<1x8x4xf32>
    %53 = vector.shape_cast %52 : vector<1x8x4xf32> to vector<8x4xf32>
    %cst_31 = arith.constant dense<0.000000e+00> : vector<8x256xf32>
    %54 = tpu.matmul %53, %51, %cst_31 {dimension_numbers = #tpu.dot_dimension_numbers<[1], [0], [0], [1], [0, 0, 1, 1], [], []>} : vector<8x4xf32>, vector<4x256xf32>, vector<8x256xf32> -> vector<8x256xf32>
    %55 = arith.addf %48, %54 : vector<8x256xf32>
    %c0_32 = arith.constant 0 : index
    %c127 = arith.constant 127 : index
    %56 = vector.load %arg6[%c0_32, %c127] : memref<4x512xf32, #tpu.memory_space<vmem>>, vector<4x256xf32>
    %cst_33 = arith.constant 0.000000e+00 : f32
    %57 = vector.broadcast %cst_33 : f32 to vector<4x256xf32>
    %58 = arith.select %33, %56, %57 : vector<4x256xi1>, vector<4x256xf32>
    %c3 = arith.constant 3 : index
    %c0_34 = arith.constant 0 : index
    %c0_35 = arith.constant 0 : index
    %59 = vector.load %arg4[%c3, %c0_34, %c0_35] : memref<9x8x4xf32, #tpu.memory_space<vmem>>, vector<1x8x4xf32>
    %60 = vector.shape_cast %59 : vector<1x8x4xf32> to vector<8x4xf32>
    %cst_36 = arith.constant dense<0.000000e+00> : vector<8x256xf32>
    %61 = tpu.matmul %60, %58, %cst_36 {dimension_numbers = #tpu.dot_dimension_numbers<[1], [0], [0], [1], [0, 0, 1, 1], [], []>} : vector<8x4xf32>, vector<4x256xf32>, vector<8x256xf32> -> vector<8x256xf32>
    %62 = arith.addf %55, %61 : vector<8x256xf32>
    %c0_37 = arith.constant 0 : index
    %c128_38 = arith.constant 128 : index
    %63 = vector.load %arg6[%c0_37, %c128_38] : memref<4x512xf32, #tpu.memory_space<vmem>>, vector<4x256xf32>
    %c4 = arith.constant 4 : index
    %c0_39 = arith.constant 0 : index
    %c0_40 = arith.constant 0 : index
    %64 = vector.load %arg4[%c4, %c0_39, %c0_40] : memref<9x8x4xf32, #tpu.memory_space<vmem>>, vector<1x8x4xf32>
    %65 = vector.shape_cast %64 : vector<1x8x4xf32> to vector<8x4xf32>
    %cst_41 = arith.constant dense<0.000000e+00> : vector<8x256xf32>
    %66 = tpu.matmul %65, %63, %cst_41 {dimension_numbers = #tpu.dot_dimension_numbers<[1], [0], [0], [1], [0, 0, 1, 1], [], []>} : vector<8x4xf32>, vector<4x256xf32>, vector<8x256xf32> -> vector<8x256xf32>
    %67 = arith.addf %62, %66 : vector<8x256xf32>
    %c0_42 = arith.constant 0 : index
    %c129 = arith.constant 129 : index
    %68 = vector.load %arg6[%c0_42, %c129] : memref<4x512xf32, #tpu.memory_space<vmem>>, vector<4x256xf32>
    %cst_43 = arith.constant 0.000000e+00 : f32
    %69 = vector.broadcast %cst_43 : f32 to vector<4x256xf32>
    %70 = arith.select %35, %68, %69 : vector<4x256xi1>, vector<4x256xf32>
    %c5 = arith.constant 5 : index
    %c0_44 = arith.constant 0 : index
    %c0_45 = arith.constant 0 : index
    %71 = vector.load %arg4[%c5, %c0_44, %c0_45] : memref<9x8x4xf32, #tpu.memory_space<vmem>>, vector<1x8x4xf32>
    %72 = vector.shape_cast %71 : vector<1x8x4xf32> to vector<8x4xf32>
    %cst_46 = arith.constant dense<0.000000e+00> : vector<8x256xf32>
    %73 = tpu.matmul %72, %70, %cst_46 {dimension_numbers = #tpu.dot_dimension_numbers<[1], [0], [0], [1], [0, 0, 1, 1], [], []>} : vector<8x4xf32>, vector<4x256xf32>, vector<8x256xf32> -> vector<8x256xf32>
    %74 = arith.addf %67, %73 : vector<8x256xf32>
    %c0_47 = arith.constant 0 : index
    %c143 = arith.constant 143 : index
    %75 = vector.load %arg6[%c0_47, %c143] : memref<4x512xf32, #tpu.memory_space<vmem>>, vector<4x256xf32>
    %cst_48 = arith.constant 0.000000e+00 : f32
    %76 = vector.broadcast %cst_48 : f32 to vector<4x256xf32>
    %77 = arith.select %33, %75, %76 : vector<4x256xi1>, vector<4x256xf32>
    %c6 = arith.constant 6 : index
    %c0_49 = arith.constant 0 : index
    %c0_50 = arith.constant 0 : index
    %78 = vector.load %arg4[%c6, %c0_49, %c0_50] : memref<9x8x4xf32, #tpu.memory_space<vmem>>, vector<1x8x4xf32>
    %79 = vector.shape_cast %78 : vector<1x8x4xf32> to vector<8x4xf32>
    %cst_51 = arith.constant dense<0.000000e+00> : vector<8x256xf32>
    %80 = tpu.matmul %79, %77, %cst_51 {dimension_numbers = #tpu.dot_dimension_numbers<[1], [0], [0], [1], [0, 0, 1, 1], [], []>} : vector<8x4xf32>, vector<4x256xf32>, vector<8x256xf32> -> vector<8x256xf32>
    %81 = arith.addf %74, %80 : vector<8x256xf32>
    %c0_52 = arith.constant 0 : index
    %c144 = arith.constant 144 : index
    %82 = vector.load %arg6[%c0_52, %c144] : memref<4x512xf32, #tpu.memory_space<vmem>>, vector<4x256xf32>
    %c7 = arith.constant 7 : index
    %c0_53 = arith.constant 0 : index
    %c0_54 = arith.constant 0 : index
    %83 = vector.load %arg4[%c7, %c0_53, %c0_54] : memref<9x8x4xf32, #tpu.memory_space<vmem>>, vector<1x8x4xf32>
    %84 = vector.shape_cast %83 : vector<1x8x4xf32> to vector<8x4xf32>
    %cst_55 = arith.constant dense<0.000000e+00> : vector<8x256xf32>
    %85 = tpu.matmul %84, %82, %cst_55 {dimension_numbers = #tpu.dot_dimension_numbers<[1], [0], [0], [1], [0, 0, 1, 1], [], []>} : vector<8x4xf32>, vector<4x256xf32>, vector<8x256xf32> -> vector<8x256xf32>
    %86 = arith.addf %81, %85 : vector<8x256xf32>
    %c0_56 = arith.constant 0 : index
    %c145 = arith.constant 145 : index
    %87 = vector.load %arg6[%c0_56, %c145] : memref<4x512xf32, #tpu.memory_space<vmem>>, vector<4x256xf32>
    %cst_57 = arith.constant 0.000000e+00 : f32
    %88 = vector.broadcast %cst_57 : f32 to vector<4x256xf32>
    %89 = arith.select %35, %87, %88 : vector<4x256xi1>, vector<4x256xf32>
    %c8 = arith.constant 8 : index
    %c0_58 = arith.constant 0 : index
    %c0_59 = arith.constant 0 : index
    %90 = vector.load %arg4[%c8, %c0_58, %c0_59] : memref<9x8x4xf32, #tpu.memory_space<vmem>>, vector<1x8x4xf32>
    %91 = vector.shape_cast %90 : vector<1x8x4xf32> to vector<8x4xf32>
    %cst_60 = arith.constant dense<0.000000e+00> : vector<8x256xf32>
    %92 = tpu.matmul %91, %89, %cst_60 {dimension_numbers = #tpu.dot_dimension_numbers<[1], [0], [0], [1], [0, 0, 1, 1], [], []>} : vector<8x4xf32>, vector<4x256xf32>, vector<8x256xf32> -> vector<8x256xf32>
    %93 = arith.addf %86, %92 : vector<8x256xf32>
    %c0_61 = arith.constant 0 : index
    %c0_62 = arith.constant 0 : index
    %c0_63 = arith.constant 0 : index
    %94 = vector.load %arg5[%c0_61, %c0_62, %c0_63] : memref<1x12x256xf32, #tpu.memory_space<vmem>>, vector<1x8x256xf32>
    %95 = vector.shape_cast %94 : vector<1x8x256xf32> to vector<8x256xf32>
    %96 = vector.shape_cast %93 : vector<8x256xf32> to vector<1x8x256xf32>
    tpu.vector_store %arg5[%c0_61, %c0_62, %c0_63], %96 {strides = array<i32>} : memref<1x12x256xf32, #tpu.memory_space<vmem>>, vector<1x8x256xf32>,
    %c0_64 = arith.constant 0 : index
    %c8_65 = arith.constant 8 : index
    %c0_66 = arith.constant 0 : index
    %97 = vector.load %arg5[%c0_64, %c8_65, %c0_66] : memref<1x12x256xf32, #tpu.memory_space<vmem>>, vector<1x4x256xf32>
    %98 = vector.shape_cast %97 : vector<1x4x256xf32> to vector<4x256xf32>
    %99 = vector.shape_cast %1 : vector<4x256xf32> to vector<1x4x256xf32>
    tpu.vector_store %arg5[%c0_64, %c8_65, %c0_66], %99 {strides = array<i32>} : memref<1x12x256xf32, #tpu.memory_space<vmem>>, vector<1x4x256xf32>,
    return
  }
  func.func @transform_0(%arg0: i32) -> (i32, i32) {
    %c0_i32 = arith.constant 0 : i32
    %c0_i32_0 = arith.constant 0 : i32
    %c0_i32_1 = arith.constant 0 : i32
    return %c0_i32, %c0_i32_0 : i32, i32
  }
  func.func @transform_1(%arg0: i32) -> (i32, i32) {
    %c0_i32 = arith.constant 0 : i32
    %c0_i32_0 = arith.constant 0 : i32
    %c0_i32_1 = arith.constant 0 : i32
    return %c0_i32, %c0_i32_0 : i32, i32
  }
  func.func @transform_2(%arg0: i32) -> (i32, i32, i32) {
    %c0_i32 = arith.constant 0 : i32
    %c0_i32_0 = arith.constant 0 : i32
    %c0_i32_1 = arith.constant 0 : i32
    return %arg0, %c0_i32, %c0_i32_0 : i32, i32, i32
  }
  func.func @transform_3(%arg0: i32) -> (i32, i32, i32) {
    %c0_i32 = arith.constant 0 : i32
    %c0_i32_0 = arith.constant 0 : i32
    %c0_i32_1 = arith.constant 0 : i32
    %c0_i32_2 = arith.constant 0 : i32
    return %c0_i32, %c0_i32_0, %c0_i32_1 : i32, i32, i32
  }
  func.func @transform_4(%arg0: i32) -> (i32, i32, i32) {
    %c0_i32 = arith.constant 0 : i32
    %c0_i32_0 = arith.constant 0 : i32
    %c0_i32_1 = arith.constant 0 : i32
    return %arg0, %c0_i32, %c0_i32_0 : i32, i32, i32
  }
}

</mosaic_0001>

<llo_original>
// kernel: tpu_custom_call.1
$region0: #{tpu_custom_call.1}
  #allocation0 [shape = 'u32[]', space=smem, size = 0x4, offset = 0x4, fixed_abs, tag = 'smem constant byte address 0x4 - core index']
  #allocation1 [shape = 'u32[144,128]{1,0:T(1,128)}', space=vmem, size = 0x12000, scoped, tag = 'internal scratch']
  #allocation2 [shape = 'f32[4,512]{1,0:T(4,128)}', space=vmem, size = 0x2000, scoped, tag = 'scratch operand']
  %s0 = inlined_call_operand.vmem [shape: f32[4,1], index: 0, kind: input, shape index: {}]
  %s1 = inlined_call_operand.vmem [shape: f32[4,1], index: 1, kind: input, shape index: {}]
  %s2 = inlined_call_operand.vmem [shape: f32[2,4,256], index: 2, kind: input, shape index: {}]
  %s3 = inlined_call_operand.vmem [shape: f32[9,8,4], index: 3, kind: input, shape index: {}]
  %s4 = inlined_call_operand.vmem [shape: f32[2,12,256], index: 4, kind: output, shape index: {}]
  %s5 = sld [smem:[#allocation0]]
  $region49: #{tpu_custom_call.1} parent=0
    _
  %s7 = ssub.s32 1, %s5
  %s8 = scalar_select 0, %s7, %s5
  loop: start=0, step=1, limit=4
  $region2: #{tpu_custom_call.1} parent=0 // loop_pre_header
    _
  $region3: #{tpu_custom_call.1} parent=0 // loop_header
    %s10 = sphi 0, %s14
    %p11 = scmp.ge.s32.totalorder %s10, 4
    %s18 = sphi 0, %s18
    %s20 = sphi 0, %s18
    %s21 = sphi 0, %s20
    %s35 = sphi 0, %s21
    %s39 = sphi 0, %s39
    %s41 = sphi 0, %s39
    %s42 = sphi 0, %s41
    %s56 = sphi 0, %s42
    %s62 = sphi 0, %s64
    %s65 = sphi 0, %s62
    %s66 = sphi 0, %s65
    %s82 = sphi 0, %s66
    %s86 = sphi 0, %s86
    %s88 = sphi 0, %s86
    %s89 = sphi 0, %s88
    %s103 = sphi 0, %s89
    %s109 = sphi 0, %s111
    %s112 = sphi 0, %s109
    %s113 = sphi 0, %s112
    %s129 = sphi 0, %s113
  $region4: #{tpu_custom_call.1} parent=0 // loop_header_branch
    %13 = sbr.rel (%p11) target = $region8
  $region5: #{tpu_custom_call.1} parent=0 // loop_body
    %s15 = ssub.s32 %s10, 1
    %s16 = ssub.s32 %s10, 2
    %s17 = sadd.s32 %s10, 1
    %s19 = sadd.s32 %s18, 1
    %p22 = scmp.eq.s32.totalorder %s10, 1
    %p23 = scmp.ne.s32.totalorder %s18, %s20
    %p24 = scmp.eq.s32.totalorder %s10, 0
    %p25 = por %p23, %p24
    %p26 = scmp.ne.s32.totalorder %s18, %s20
    %p27 = scmp.eq.s32.totalorder %s15, 1
    %p28 = por %p26, %p27
    %p29 = scmp.ne.s32.totalorder %s20, %s21
    %p30 = scmp.eq.s32.totalorder %s15, 0
    %p31 = por %p29, %p30
    %p32 = scmp.ne.s32.totalorder %s20, %s21
    %p33 = scmp.eq.s32.totalorder %s16, 1
    %p34 = por %p32, %p33
    %p36 = scmp.ne.s32.totalorder %s21, %s35
    %p37 = scmp.eq.s32.totalorder %s16, 0
    %p38 = por %p36, %p37
    %s40 = sadd.s32 %s39, 1
    %p43 = scmp.eq.s32.totalorder %s10, 1
    %p44 = scmp.ne.s32.totalorder %s39, %s41
    %p45 = scmp.eq.s32.totalorder %s10, 0
    %p46 = por %p44, %p45
    %p47 = scmp.ne.s32.totalorder %s39, %s41
    %p48 = scmp.eq.s32.totalorder %s15, 1
    %p49 = por %p47, %p48
    %p50 = scmp.ne.s32.totalorder %s41, %s42
    %p51 = scmp.eq.s32.totalorder %s15, 0
    %p52 = por %p50, %p51
    %p53 = scmp.ne.s32.totalorder %s41, %s42
    %p54 = scmp.eq.s32.totalorder %s16, 1
    %p55 = por %p53, %p54
    %p57 = scmp.ne.s32.totalorder %s42, %s56
    %p58 = scmp.eq.s32.totalorder %s16, 0
    %p59 = por %p57, %p58
    %s60 = ssub.s32 %s10, %s17
    %p61 = scmp.eq.s32.totalorder %s60, 0
    %s63 = sadd.s32 %s62, 1
    %s64 = scalar_select %p61, %s62, %s63
    %p67 = pneg %p61
    %p68 = scmp.eq.s32.totalorder %s10, 1
    %p69 = por %p67, %p68
    %p70 = scmp.ne.s32.totalorder %s62, %s65
    %p71 = scmp.eq.s32.totalorder %s10, 0
    %p72 = por %p70, %p71
    %p73 = scmp.ne.s32.totalorder %s62, %s65
    %p74 = scmp.eq.s32.totalorder %s15, 1
    %p75 = por %p73, %p74
    %p76 = scmp.ne.s32.totalorder %s65, %s66
    %p77 = scmp.eq.s32.totalorder %s15, 0
    %p78 = por %p76, %p77
    %p79 = scmp.ne.s32.totalorder %s65, %s66
    %p80 = scmp.eq.s32.totalorder %s16, 1
    %p81 = por %p79, %p80
    %p83 = scmp.ne.s32.totalorder %s66, %s82
    %p84 = scmp.eq.s32.totalorder %s16, 0
    %p85 = por %p83, %p84
    %s87 = sadd.s32 %s86, 1
    %p90 = scmp.eq.s32.totalorder %s10, 1
    %p91 = scmp.ne.s32.totalorder %s86, %s88
    %p92 = scmp.eq.s32.totalorder %s10, 0
    %p93 = por %p91, %p92
    %p94 = scmp.ne.s32.totalorder %s86, %s88
    %p95 = scmp.eq.s32.totalorder %s15, 1
    %p96 = por %p94, %p95
    %p97 = scmp.ne.s32.totalorder %s88, %s89
    %p98 = scmp.eq.s32.totalorder %s15, 0
    %p99 = por %p97, %p98
    %p100 = scmp.ne.s32.totalorder %s88, %s89
    %p101 = scmp.eq.s32.totalorder %s16, 1
    %p102 = por %p100, %p101
    %p104 = scmp.ne.s32.totalorder %s89, %s103
    %p105 = scmp.eq.s32.totalorder %s16, 0
    %p106 = por %p104, %p105
    %s107 = ssub.s32 %s10, %s17
    %p108 = scmp.eq.s32.totalorder %s107, 0
    %s110 = sadd.s32 %s109, 1
    %s111 = scalar_select %p108, %s109, %s110
    %p114 = pneg %p108
    %p115 = scmp.eq.s32.totalorder %s10, 1
    %p116 = por %p114, %p115
    %p117 = scmp.ne.s32.totalorder %s109, %s112
    %p118 = scmp.eq.s32.totalorder %s10, 0
    %p119 = por %p117, %p118
    %p120 = scmp.ne.s32.totalorder %s109, %s112
    %p121 = scmp.eq.s32.totalorder %s15, 1
    %p122 = por %p120, %p121
    %p123 = scmp.ne.s32.totalorder %s112, %s113
    %p124 = scmp.eq.s32.totalorder %s15, 0
    %p125 = por %p123, %p124
    %p126 = scmp.ne.s32.totalorder %s112, %s113
    %p127 = scmp.eq.s32.totalorder %s16, 1
    %p128 = por %p126, %p127
    %p130 = scmp.ne.s32.totalorder %s113, %s129
    %p131 = scmp.eq.s32.totalorder %s16, 0
    %p132 = por %p130, %p131
    %p133 = scmp.le.s32.totalorder 1, %s10
    %p134 = scmp.lt.s32.totalorder %s10, 3
    %p135 = pnand %p133, %p134
    %p136 = pneg %p135
    // Predicated region
    $region9: #{tpu_custom_call.1} parent=5 // pred_check
      _
    $region10: #{tpu_custom_call.1} parent=5 // pred_check_branch
      %138 = sbr.rel (%p135) target = $region12
    $region11: #{tpu_custom_call.1} parent=5 // pred_region
      %s139 = ssub.s32 %s10, 1
      // Predicated region
      $region13: #{tpu_custom_call.1} parent=11 // pred_check
        %p140 = pneg %p31
      $region14: #{tpu_custom_call.1} parent=11 // pred_check_branch
        %142 = sbr.rel (%p140) target = $region16
      $region15: #{tpu_custom_call.1} parent=11 // pred_region
        _
      $region16: #{tpu_custom_call.1} parent=11 // pred_fallthru
        _
      // Predicated region
      $region17: #{tpu_custom_call.1} parent=11 // pred_check
        %p143 = pneg %p52
      $region18: #{tpu_custom_call.1} parent=11 // pred_check_branch
        %145 = sbr.rel (%p143) target = $region20
      $region19: #{tpu_custom_call.1} parent=11 // pred_region
        _
      $region20: #{tpu_custom_call.1} parent=11 // pred_fallthru
        _
      // Predicated region
      $region21: #{tpu_custom_call.1} parent=11 // pred_check
        %p146 = pneg %p99
      $region22: #{tpu_custom_call.1} parent=11 // pred_check_branch
        %148 = sbr.rel (%p146) target = $region24
      $region23: #{tpu_custom_call.1} parent=11 // pred_region
        _
      $region24: #{tpu_custom_call.1} parent=11 // pred_fallthru
        _
    $region12: #{tpu_custom_call.1} parent=5 // pred_fallthru
      _
    %p149 = scmp.lt.s32.totalorder %s10, 2
    // Predicated region
    $region25: #{tpu_custom_call.1} parent=5 // pred_check
      %p150 = pneg %p149
    $region26: #{tpu_custom_call.1} parent=5 // pred_check_branch
      %152 = sbr.rel (%p150) target = $region28
    $region27: #{tpu_custom_call.1} parent=5 // pred_region
      // Predicated region
      $region29: #{tpu_custom_call.1} parent=27 // pred_check
        %p153 = pneg %p72
      $region30: #{tpu_custom_call.1} parent=27 // pred_check_branch
        %155 = sbr.rel (%p153) target = $region32
      $region31: #{tpu_custom_call.1} parent=27 // pred_region
        %p156 = scmp.lt.s32.totalorder %s10, 1
        %s157 = scalar_select %p156, %s10, 1
        %s158 = smul.addr %s157, 2
        %s159 = smul.addr %s158, 4
        %s160 = scalar_lea.vmem %s2, %s159
      $region32: #{tpu_custom_call.1} parent=27 // pred_fallthru
        _
    $region28: #{tpu_custom_call.1} parent=5 // pred_fallthru
      _
    %p161 = scmp.le.s32.totalorder 1, %s10
    %p162 = scmp.lt.s32.totalorder %s10, 3
    %p163 = pnand %p161, %p162
    %p164 = pneg %p163
    // Predicated region
    $region33: #{tpu_custom_call.1} parent=5 // pred_check
      _
    $region34: #{tpu_custom_call.1} parent=5 // pred_check_branch
      %166 = sbr.rel (%p163) target = $region36
    $region35: #{tpu_custom_call.1} parent=5 // pred_region
      %s167 = ssub.s32 %s10, 1
      %p168 = pneg %p31
      %p169 = pneg %p28
      %p170 = pneg %p52
      %p171 = pneg %p49
      %p172 = scmp.lt.s32.totalorder %s15, 1
      %s173 = scalar_select %p172, %s15, 1
      %s174 = smul.addr %s173, 2
      %s175 = smul.addr %s174, 4
      %s176 = scalar_lea.vmem %s2, %s175
      %p177 = pneg %p78
      %p178 = pneg %p75
      %p179 = pneg %p99
      %p180 = pneg %p96
      %p181 = pneg %p125
      %p182 = pneg %p122
      %p183 = scmp.lt.s32.totalorder %s15, 1
      %s184 = scalar_select %p183, %s15, 1
      %s185 = smul.addr %s184, 4
      %s186 = smul.addr %s185, 8
      %s187 = scalar_lea.vmem %s4, %s186
      %p188 = scmp.lt.s32.totalorder %s15, 1
      %s189 = scalar_select %p188, %s15, 1
      %s190 = smul.addr %s189, 2
      %s191 = smul.addr %s190, 4
      %s192 = scalar_lea.vmem %s2, %s191
      %p193 = scmp.lt.s32.totalorder %s15, 1
      %s194 = scalar_select %p193, %s15, 1
      %s195 = smul.addr %s194, 4
      %s196 = smul.addr %s195, 8
      %s197 = scalar_lea.vmem %s4, %s196
      %v198 = vld [vmem:[%s192] sm:$0xff]
      %v199 = vld [vmem:[%s0] sm:$0xf]
      %201 = vset.pattern.permute.xlu0 0
      %202 = vperm.xlu0 %201, %v199
      %v203 = vpop.permute.xlu0 %202
      %v205 = vunpack.c.l.s4 839922192
      %v206 = vunpack.c.0.s8 %v205
      %v207 = vlaneseq
      %v208 = vshrl.u32 %v207, 7
      %v209 = vsub.s32 %v206, %v208
      %v210 = vrot.slane %v203, %v209
      %v212 = vmul.f32 %v198, %v210
      %v213 = vld [vmem:[%s1] sm:$0xf]
      %215 = vset.pattern.permute.xlu0 0
      %216 = vperm.xlu0 %215, %v213
      %v217 = vpop.permute.xlu0 %216
      %v219 = vunpack.c.l.s4 839922192
      %v220 = vunpack.c.0.s8 %v219
      %v221 = vlaneseq
      %v222 = vshrl.u32 %v221, 7
      %v223 = vsub.s32 %v220, %v222
      %v224 = vrot.slane %v217, %v223
      %v226 = vadd.f32 %v212, %v224
      %v227 = vmax.f32 %v226, 0.0
      %228 = vst [vmem:[#allocation2] sm:$0xf] 0.0
      %229 = vst [vmem:[#allocation2 + $0xc] sm:$0xf] 0.0
      %230 = vst [vmem:[#allocation2 + $0x4] sm:$0xff] %v227
      %v231 = vlaneseq
      %v232 = vand.u32 %v231, 127
      %v233 = vadd.s32 %v232, 128
      %vm234 = vcmp.lt.s32.totalorder %v232, 0
      %v235 = vsub.s32 0, %v232
      %v236 = vsel %vm234, %v235, %v232
      %v237 = vshrl.u32 %v236, 4
      %v238 = vand.u32 %v236, 15
      %v239 = vsub.s32 0, %v238
      %v240 = vsel %vm234, %v239, %v238
      %vm241 = vcmp.lt.s32.totalorder %v233, 0
      %v242 = vsub.s32 0, %v233
      %v243 = vsel %vm241, %v242, %v233
      %v244 = vshrl.u32 %v243, 4
      %v245 = vand.u32 %v243, 15
      %v246 = vsub.s32 0, %v245
      %v247 = vsel %vm241, %v246, %v245
      %vm248 = vcmp.ne.s32.totalorder %v240, 0
      %vm249 = vcmp.ne.s32.totalorder %v247, 0
      %vm250 = vcmp.lt.s32.totalorder %v240, 0
      %vm251 = vcmp.lt.s32.totalorder %v247, 0
      %vm252 = vmand %vm250, %vm248
      %vm253 = vmand %vm251, %vm249
      %v254 = vadd.s32 %v240, 16
      %v255 = vadd.s32 %v247, 16
      %v256 = vsel %vm252, %v254, %v240
      %v257 = vsel %vm253, %v255, %v247
      %vm258 = vcmp.ge.s32.totalorder %v256, 1
      %vm259 = vcmp.ge.s32.totalorder %v257, 1
      %vm260 = vcmp.le.s32.totalorder %v256, 14
      %vm261 = vcmp.le.s32.totalorder %v257, 14
      %v262 = vld [vmem:[#allocation2] sm:$0xff]
      %v263 = vld [vmem:[#allocation2 + $0x8] sm:$0xf]
      %v266 = vcombine.high %v262, %v262
      %267 = vrot.lane.b32.xlu0 %v262, 17
      %v268 = vpop.permute.xlu0 %267
      %269 = vrot.lane.b32.xlu0 %v266, 17
      %v270 = vpop.permute.xlu0 %269
      %271 = vrot.lane.b32.xlu0 %v263, 17
      %v272 = vpop.permute.xlu0 %271
      %vm273 = vcmask 138240
      %v274 = vsel %vm273, %v268, %v270
      %v275 = vsel %vm273, %v270, %v272
      %v278 = vsel %vm258, %v274, 0.0
      %v279 = vsel %vm259, %v275, 0.0
      %v280 = vld [vmem:[%s3] sm:$0xff]
      %s281 = scalar_lea.vmem %s3, 8
      %v282 = vld [vmem:[%s281] sm:$0xff]
      %283 = vrot.lane.b32.xlu0 %v262, 16
      %v284 = vpop.permute.xlu0 %283
      %285 = vrot.lane.b32.xlu0 %v266, 16
      %v286 = vpop.permute.xlu0 %285
      %287 = vrot.lane.b32.xlu0 %v263, 16
      %v288 = vpop.permute.xlu0 %287
      %vm289 = vcmask 130048
      %v290 = vsel %vm289, %v284, %v286
      %v291 = vsel %vm289, %v286, %v288
      %vm292 = vcmask 31744
      %v294 = vsel %vm292, %v282, 0
      %vm296 = vcmask 1043456
      %v297 = vsel %vm296, %v290, 0
      %v299 = vsel %vm296, %v291, 0
      %301 = vmatprep.subr.mxu0 %v299
      %302 = vmatpush1.msra.mxu0 %v297
      %303 = vmatprep.subr.mxu0 0.0
      %304 = vmatpush1.msra.mxu0 0.0
      %305 = vmatprep.subr.mxu0 0.0
      %306 = vmatpush1.msra.mxu0 0.0
      %307 = vmatprep.subr.mxu0 0.0
      %308 = vmatpush1.msra.mxu0 0.0
      %309 = vmatprep.subr.mxu0 0.0
      %310 = vmatpush1.msra.mxu0 0.0
      %311 = vmatprep.subr.mxu0 0.0
      %312 = vmatpush1.msra.mxu0 0.0
      %313 = vmatprep.subr.mxu0 0.0
      %314 = vmatpush1.msra.mxu0 0.0
      %315 = vmatprep.subr.mxu0 0.0
      %316 = vmatpush1.msra.mxu0 0.0
      %317 = vmatprep.subr.mxu0 0.0
      %318 = vmatpush1.msra.mxu0 0.0
      %319 = vmatprep.subr.mxu0 0.0
      %320 = vmatpush1.msra.mxu0 0.0
      %321 = vmatprep.subr.mxu0 0.0
      %322 = vmatpush1.msra.mxu0 0.0
      %323 = vmatprep.subr.mxu0 0.0
      %324 = vmatpush1.msra.mxu0 0.0
      %325 = vmatprep.subr.mxu0 0.0
      %326 = vmatpush1.msra.mxu0 0.0
      %327 = vmatprep.subr.mxu0 0.0
      %328 = vmatpush1.msra.mxu0 0.0
      %329 = vmatprep.subr.mxu0 0.0
      %330 = vmatpush1.msra.mxu0 0.0
      %331 = vmatprep.subr.mxu0 0.0
      %332 = vmatpush1.msra.mxu0 0.0
      %333 = vmatprep.subr.mxu0 0.0
      %334 = vmatpush1.msra.mxu0 0.0
      %335 = vmatprep.subr.mxu0 0.0
      %336 = vmatpush1.msra.mxu0 0.0
      %337 = vmatprep.subr.mxu0 0.0
      %338 = vmatpush1.msra.mxu0 0.0
      %339 = vmatprep.subr.mxu0 0.0
      %340 = vmatpush1.msra.mxu0 0.0
      %341 = vmatprep.subr.mxu0 0.0
      %342 = vmatpush1.msra.mxu0 0.0
      %343 = vmatprep.subr.mxu0 0.0
      %344 = vmatpush1.msra.mxu0 0.0
      %345 = vmatprep.subr.mxu0 0.0
      %346 = vmatpush1.msra.mxu0 0.0
      %347 = vmatprep.subr.mxu0 0.0
      %348 = vmatpush1.msra.mxu0 0.0
      %349 = vmatprep.subr.mxu0 0.0
      %350 = vmatpush1.msra.mxu0 0.0
      %351 = vmatprep.subr.mxu0 0.0
      %352 = vmatpush1.msra.mxu0 0.0
      %353 = vmatprep.subr.mxu0 0.0
      %354 = vmatpush1.msra.mxu0 0.0
      %355 = vmatprep.subr.mxu0 0.0
      %356 = vmatpush1.msra.mxu0 0.0
      %357 = vmatprep.subr.mxu0 0.0
      %358 = vmatpush1.msra.mxu0 0.0
      %359 = vmatprep.subr.mxu0 0.0
      %360 = vmatpush1.msra.mxu0 0.0
      %361 = vmatprep.subr.mxu0 0.0
      %362 = vmatpush1.msra.mxu0 0.0
      %363 = vmatprep.subr.mxu0 0.0
      %364 = vmatpush1.msra.mxu0 0.0
      %365 = vmatprep.mubr.f32.mxu0 0.0
      %366 = vmatmul.mubr.f32.gmra.mrb[0].mxu0 %v294
      %v367 = vpop.f32.mrb[0].mxu0
      %v368 = vadd.f32 0.0, %v367
      %v369 = vpop.f32.mrb[0].mxu0
      %v370 = vadd.f32 0.0, %v369
      %371 = vdwg.mxu0
      %v373 = vsel %vm292, %v280, 0
      %v376 = vsel %vm296, %v278, 0
      %v379 = vsel %vm296, %v279, 0
      %381 = vmatprep.subr.mxu0 %v379
      %382 = vmatpush1.msra.mxu0 %v376
      %383 = vmatprep.subr.mxu0 0.0
      %384 = vmatpush1.msra.mxu0 0.0
      %385 = vmatprep.subr.mxu0 0.0
      %386 = vmatpush1.msra.mxu0 0.0
      %387 = vmatprep.subr.mxu0 0.0
      %388 = vmatpush1.msra.mxu0 0.0
      %389 = vmatprep.subr.mxu0 0.0
      %390 = vmatpush1.msra.mxu0 0.0
      %391 = vmatprep.subr.mxu0 0.0
      %392 = vmatpush1.msra.mxu0 0.0
      %393 = vmatprep.subr.mxu0 0.0
      %394 = vmatpush1.msra.mxu0 0.0
      %395 = vmatprep.subr.mxu0 0.0
      %396 = vmatpush1.msra.mxu0 0.0
      %397 = vmatprep.subr.mxu0 0.0
      %398 = vmatpush1.msra.mxu0 0.0
      %399 = vmatprep.subr.mxu0 0.0
      %400 = vmatpush1.msra.mxu0 0.0
      %401 = vmatprep.subr.mxu0 0.0
      %402 = vmatpush1.msra.mxu0 0.0
      %403 = vmatprep.subr.mxu0 0.0
      %404 = vmatpush1.msra.mxu0 0.0
      %405 = vmatprep.subr.mxu0 0.0
      %406 = vmatpush1.msra.mxu0 0.0
      %407 = vmatprep.subr.mxu0 0.0
      %408 = vmatpush1.msra.mxu0 0.0
      %409 = vmatprep.subr.mxu0 0.0
      %410 = vmatpush1.msra.mxu0 0.0
      %411 = vmatprep.subr.mxu0 0.0
      %412 = vmatpush1.msra.mxu0 0.0
      %413 = vmatprep.subr.mxu0 0.0
      %414 = vmatpush1.msra.mxu0 0.0
      %415 = vmatprep.subr.mxu0 0.0
      %416 = vmatpush1.msra.mxu0 0.0
      %417 = vmatprep.subr.mxu0 0.0
      %418 = vmatpush1.msra.mxu0 0.0
      %419 = vmatprep.subr.mxu0 0.0
      %420 = vmatpush1.msra.mxu0 0.0
      %421 = vmatprep.subr.mxu0 0.0
      %422 = vmatpush1.msra.mxu0 0.0
      %423 = vmatprep.subr.mxu0 0.0
      %424 = vmatpush1.msra.mxu0 0.0
      %425 = vmatprep.subr.mxu0 0.0
      %426 = vmatpush1.msra.mxu0 0.0
      %427 = vmatprep.subr.mxu0 0.0
      %428 = vmatpush1.msra.mxu0 0.0
      %429 = vmatprep.subr.mxu0 0.0
      %430 = vmatpush1.msra.mxu0 0.0
      %431 = vmatprep.subr.mxu0 0.0
      %432 = vmatpush1.msra.mxu0 0.0
      %433 = vmatprep.subr.mxu0 0.0
      %434 = vmatpush1.msra.mxu0 0.0
      %435 = vmatprep.subr.mxu0 0.0
      %436 = vmatpush1.msra.mxu0 0.0
      %437 = vmatprep.subr.mxu0 0.0
      %438 = vmatpush1.msra.mxu0 0.0
      %439 = vmatprep.subr.mxu0 0.0
      %440 = vmatpush1.msra.mxu0 0.0
      %441 = vmatprep.subr.mxu0 0.0
      %442 = vmatpush1.msra.mxu0 0.0
      %443 = vmatprep.subr.mxu0 0.0
      %444 = vmatpush1.msra.mxu0 0.0
      %445 = vmatprep.mubr.f32.mxu0 0.0
      %446 = vmatmul.mubr.f32.gmra.mrb[0].mxu0 %v373
      %v447 = vpop.f32.mrb[0].mxu0
      %v448 = vadd.f32 %v368, %v447
      %v449 = vpop.f32.mrb[0].mxu0
      %v450 = vadd.f32 %v370, %v449
      %451 = vdwg.mxu0
      %v452 = vld [vmem:[#allocation2] sm:$0xff]
      %v453 = vld [vmem:[#allocation2 + $0x8] sm:$0xf]
      %v456 = vcombine.high %v452, %v452
      %457 = vrot.lane.b32.xlu0 %v452, 15
      %v458 = vpop.permute.xlu0 %457
      %459 = vrot.lane.b32.xlu0 %v456, 15
      %v460 = vpop.permute.xlu0 %459
      %461 = vrot.lane.b32.xlu0 %v453, 15
      %v462 = vpop.permute.xlu0 %461
      %vm463 = vcmask 121856
      %v464 = vsel %vm463, %v458, %v460
      %v465 = vsel %vm463, %v460, %v462
      %v468 = vsel %vm260, %v464, 0.0
      %v469 = vsel %vm261, %v465, 0.0
      %s470 = scalar_lea.vmem %s3, 16
      %v471 = vld [vmem:[%s470] sm:$0xff]
      %v473 = vsel %vm292, %v471, 0
      %v476 = vsel %vm296, %v468, 0
      %v479 = vsel %vm296, %v469, 0
      %481 = vmatprep.subr.mxu0 %v479
      %482 = vmatpush1.msra.mxu0 %v476
      %483 = vmatprep.subr.mxu0 0.0
      %484 = vmatpush1.msra.mxu0 0.0
      %485 = vmatprep.subr.mxu0 0.0
      %486 = vmatpush1.msra.mxu0 0.0
      %487 = vmatprep.subr.mxu0 0.0
      %488 = vmatpush1.msra.mxu0 0.0
      %489 = vmatprep.subr.mxu0 0.0
      %490 = vmatpush1.msra.mxu0 0.0
      %491 = vmatprep.subr.mxu0 0.0
      %492 = vmatpush1.msra.mxu0 0.0
      %493 = vmatprep.subr.mxu0 0.0
      %494 = vmatpush1.msra.mxu0 0.0
      %495 = vmatprep.subr.mxu0 0.0
      %496 = vmatpush1.msra.mxu0 0.0
      %497 = vmatprep.subr.mxu0 0.0
      %498 = vmatpush1.msra.mxu0 0.0
      %499 = vmatprep.subr.mxu0 0.0
      %500 = vmatpush1.msra.mxu0 0.0
      %501 = vmatprep.subr.mxu0 0.0
      %502 = vmatpush1.msra.mxu0 0.0
      %503 = vmatprep.subr.mxu0 0.0
      %504 = vmatpush1.msra.mxu0 0.0
      %505 = vmatprep.subr.mxu0 0.0
      %506 = vmatpush1.msra.mxu0 0.0
      %507 = vmatprep.subr.mxu0 0.0
      %508 = vmatpush1.msra.mxu0 0.0
      %509 = vmatprep.subr.mxu0 0.0
      %510 = vmatpush1.msra.mxu0 0.0
      %511 = vmatprep.subr.mxu0 0.0
      %512 = vmatpush1.msra.mxu0 0.0
      %513 = vmatprep.subr.mxu0 0.0
      %514 = vmatpush1.msra.mxu0 0.0
      %515 = vmatprep.subr.mxu0 0.0
      %516 = vmatpush1.msra.mxu0 0.0
      %517 = vmatprep.subr.mxu0 0.0
      %518 = vmatpush1.msra.mxu0 0.0
      %519 = vmatprep.subr.mxu0 0.0
      %520 = vmatpush1.msra.mxu0 0.0
      %521 = vmatprep.subr.mxu0 0.0
      %522 = vmatpush1.msra.mxu0 0.0
      %523 = vmatprep.subr.mxu0 0.0
      %524 = vmatpush1.msra.mxu0 0.0
      %525 = vmatprep.subr.mxu0 0.0
      %526 = vmatpush1.msra.mxu0 0.0
      %527 = vmatprep.subr.mxu0 0.0
      %528 = vmatpush1.msra.mxu0 0.0
      %529 = vmatprep.subr.mxu0 0.0
      %530 = vmatpush1.msra.mxu0 0.0
      %531 = vmatprep.subr.mxu0 0.0
      %532 = vmatpush1.msra.mxu0 0.0
      %533 = vmatprep.subr.mxu0 0.0
      %534 = vmatpush1.msra.mxu0 0.0
      %535 = vmatprep.subr.mxu0 0.0
      %536 = vmatpush1.msra.mxu0 0.0
      %537 = vmatprep.subr.mxu0 0.0
      %538 = vmatpush1.msra.mxu0 0.0
      %539 = vmatprep.subr.mxu0 0.0
      %540 = vmatpush1.msra.mxu0 0.0
      %541 = vmatprep.subr.mxu0 0.0
      %542 = vmatpush1.msra.mxu0 0.0
      %543 = vmatprep.subr.mxu0 0.0
      %544 = vmatpush1.msra.mxu0 0.0
      %545 = vmatprep.mubr.f32.mxu0 0.0
      %546 = vmatmul.mubr.f32.gmra.mrb[0].mxu0 %v473
      %v547 = vpop.f32.mrb[0].mxu0
      %v548 = vadd.f32 0.0, %v547
      %v549 = vpop.f32.mrb[0].mxu0
      %v550 = vadd.f32 0.0, %v549
      %551 = vdwg.mxu0
      %v552 = vadd.f32 %v448, %v548
      %v553 = vadd.f32 %v450, %v550
      %v554 = vld [vmem:[#allocation2] sm:$0xff]
      %v555 = vld [vmem:[#allocation2 + $0x8] sm:$0xf]
      %v558 = vcombine.high %v554, %v554
      %559 = vrot.lane.b32.xlu0 %v554, 1
      %v560 = vpop.permute.xlu0 %559
      %561 = vrot.lane.b32.xlu0 %v558, 1
      %v562 = vpop.permute.xlu0 %561
      %563 = vrot.lane.b32.xlu0 %v555, 1
      %v564 = vpop.permute.xlu0 %563
      %vm565 = vcmask 7168
      %v566 = vsel %vm565, %v560, %v562
      %v567 = vsel %vm565, %v562, %v564
      %v570 = vsel %vm258, %v566, 0.0
      %v571 = vsel %vm259, %v567, 0.0
      %s572 = scalar_lea.vmem %s3, 24
      %v573 = vld [vmem:[%s572] sm:$0xff]
      %v575 = vsel %vm292, %v573, 0
      %v578 = vsel %vm296, %v570, 0
      %v581 = vsel %vm296, %v571, 0
      %583 = vmatprep.subr.mxu0 %v581
      %584 = vmatpush1.msra.mxu0 %v578
      %585 = vmatprep.subr.mxu0 0.0
      %586 = vmatpush1.msra.mxu0 0.0
      %587 = vmatprep.subr.mxu0 0.0
      %588 = vmatpush1.msra.mxu0 0.0
      %589 = vmatprep.subr.mxu0 0.0
      %590 = vmatpush1.msra.mxu0 0.0
      %591 = vmatprep.subr.mxu0 0.0
      %592 = vmatpush1.msra.mxu0 0.0
      %593 = vmatprep.subr.mxu0 0.0
      %594 = vmatpush1.msra.mxu0 0.0
      %595 = vmatprep.subr.mxu0 0.0
      %596 = vmatpush1.msra.mxu0 0.0
      %597 = vmatprep.subr.mxu0 0.0
      %598 = vmatpush1.msra.mxu0 0.0
      %599 = vmatprep.subr.mxu0 0.0
      %600 = vmatpush1.msra.mxu0 0.0
      %601 = vmatprep.subr.mxu0 0.0
      %602 = vmatpush1.msra.mxu0 0.0
      %603 = vmatprep.subr.mxu0 0.0
      %604 = vmatpush1.msra.mxu0 0.0
      %605 = vmatprep.subr.mxu0 0.0
      %606 = vmatpush1.msra.mxu0 0.0
      %607 = vmatprep.subr.mxu0 0.0
      %608 = vmatpush1.msra.mxu0 0.0
      %609 = vmatprep.subr.mxu0 0.0
      %610 = vmatpush1.msra.mxu0 0.0
      %611 = vmatprep.subr.mxu0 0.0
      %612 = vmatpush1.msra.mxu0 0.0
      %613 = vmatprep.subr.mxu0 0.0
      %614 = vmatpush1.msra.mxu0 0.0
      %615 = vmatprep.subr.mxu0 0.0
      %616 = vmatpush1.msra.mxu0 0.0
      %617 = vmatprep.subr.mxu0 0.0
      %618 = vmatpush1.msra.mxu0 0.0
      %619 = vmatprep.subr.mxu0 0.0
      %620 = vmatpush1.msra.mxu0 0.0
      %621 = vmatprep.subr.mxu0 0.0
      %622 = vmatpush1.msra.mxu0 0.0
      %623 = vmatprep.subr.mxu0 0.0
      %624 = vmatpush1.msra.mxu0 0.0
      %625 = vmatprep.subr.mxu0 0.0
      %626 = vmatpush1.msra.mxu0 0.0
      %627 = vmatprep.subr.mxu0 0.0
      %628 = vmatpush1.msra.mxu0 0.0
      %629 = vmatprep.subr.mxu0 0.0
      %630 = vmatpush1.msra.mxu0 0.0
      %631 = vmatprep.subr.mxu0 0.0
      %632 = vmatpush1.msra.mxu0 0.0
      %633 = vmatprep.subr.mxu0 0.0
      %634 = vmatpush1.msra.mxu0 0.0
      %635 = vmatprep.subr.mxu0 0.0
      %636 = vmatpush1.msra.mxu0 0.0
      %637 = vmatprep.subr.mxu0 0.0
      %638 = vmatpush1.msra.mxu0 0.0
      %639 = vmatprep.subr.mxu0 0.0
      %640 = vmatpush1.msra.mxu0 0.0
      %641 = vmatprep.subr.mxu0 0.0
      %642 = vmatpush1.msra.mxu0 0.0
      %643 = vmatprep.subr.mxu0 0.0
      %644 = vmatpush1.msra.mxu0 0.0
      %645 = vmatprep.subr.mxu0 0.0
      %646 = vmatpush1.msra.mxu0 0.0
      %647 = vmatprep.mubr.f32.mxu0 0.0
      %648 = vmatmul.mubr.f32.gmra.mrb[0].mxu0 %v575
      %v649 = vpop.f32.mrb[0].mxu0
      %v650 = vadd.f32 0.0, %v649
      %v651 = vpop.f32.mrb[0].mxu0
      %v652 = vadd.f32 0.0, %v651
      %653 = vdwg.mxu0
      %v654 = vadd.f32 %v552, %v650
      %v655 = vadd.f32 %v553, %v652
      %v656 = vld [vmem:[#allocation2 + $0x4] sm:$0xff]
      %s657 = scalar_lea.vmem %s3, 32
      %v658 = vld [vmem:[%s657] sm:$0xff]
      %v660 = vcombine.high %v656, %v656
      %v662 = vsel %vm292, %v658, 0
      %v664 = vsel %vm296, %v656, 0
      %v666 = vsel %vm296, %v660, 0
      %668 = vmatprep.subr.mxu0 %v666
      %669 = vmatpush1.msra.mxu0 %v664
      %670 = vmatprep.subr.mxu0 0.0
      %671 = vmatpush1.msra.mxu0 0.0
      %672 = vmatprep.subr.mxu0 0.0
      %673 = vmatpush1.msra.mxu0 0.0
      %674 = vmatprep.subr.mxu0 0.0
      %675 = vmatpush1.msra.mxu0 0.0
      %676 = vmatprep.subr.mxu0 0.0
      %677 = vmatpush1.msra.mxu0 0.0
      %678 = vmatprep.subr.mxu0 0.0
      %679 = vmatpush1.msra.mxu0 0.0
      %680 = vmatprep.subr.mxu0 0.0
      %681 = vmatpush1.msra.mxu0 0.0
      %682 = vmatprep.subr.mxu0 0.0
      %683 = vmatpush1.msra.mxu0 0.0
      %684 = vmatprep.subr.mxu0 0.0
      %685 = vmatpush1.msra.mxu0 0.0
      %686 = vmatprep.subr.mxu0 0.0
      %687 = vmatpush1.msra.mxu0 0.0
      %688 = vmatprep.subr.mxu0 0.0
      %689 = vmatpush1.msra.mxu0 0.0
      %690 = vmatprep.subr.mxu0 0.0
      %691 = vmatpush1.msra.mxu0 0.0
      %692 = vmatprep.subr.mxu0 0.0
      %693 = vmatpush1.msra.mxu0 0.0
      %694 = vmatprep.subr.mxu0 0.0
      %695 = vmatpush1.msra.mxu0 0.0
      %696 = vmatprep.subr.mxu0 0.0
      %697 = vmatpush1.msra.mxu0 0.0
      %698 = vmatprep.subr.mxu0 0.0
      %699 = vmatpush1.msra.mxu0 0.0
      %700 = vmatprep.subr.mxu0 0.0
      %701 = vmatpush1.msra.mxu0 0.0
      %702 = vmatprep.subr.mxu0 0.0
      %703 = vmatpush1.msra.mxu0 0.0
      %704 = vmatprep.subr.mxu0 0.0
      %705 = vmatpush1.msra.mxu0 0.0
      %706 = vmatprep.subr.mxu0 0.0
      %707 = vmatpush1.msra.mxu0 0.0
      %708 = vmatprep.subr.mxu0 0.0
      %709 = vmatpush1.msra.mxu0 0.0
      %710 = vmatprep.subr.mxu0 0.0
      %711 = vmatpush1.msra.mxu0 0.0
      %712 = vmatprep.subr.mxu0 0.0
      %713 = vmatpush1.msra.mxu0 0.0
      %714 = vmatprep.subr.mxu0 0.0
      %715 = vmatpush1.msra.mxu0 0.0
      %716 = vmatprep.subr.mxu0 0.0
      %717 = vmatpush1.msra.mxu0 0.0
      %718 = vmatprep.subr.mxu0 0.0
      %719 = vmatpush1.msra.mxu0 0.0
      %720 = vmatprep.subr.mxu0 0.0
      %721 = vmatpush1.msra.mxu0 0.0
      %722 = vmatprep.subr.mxu0 0.0
      %723 = vmatpush1.msra.mxu0 0.0
      %724 = vmatprep.subr.mxu0 0.0
      %725 = vmatpush1.msra.mxu0 0.0
      %726 = vmatprep.subr.mxu0 0.0
      %727 = vmatpush1.msra.mxu0 0.0
      %728 = vmatprep.subr.mxu0 0.0
      %729 = vmatpush1.msra.mxu0 0.0
      %730 = vmatprep.subr.mxu0 0.0
      %731 = vmatpush1.msra.mxu0 0.0
      %732 = vmatprep.mubr.f32.mxu0 0.0
      %733 = vmatmul.mubr.f32.gmra.mrb[0].mxu0 %v662
      %v734 = vpop.f32.mrb[0].mxu0
      %v735 = vadd.f32 0.0, %v734
      %v736 = vpop.f32.mrb[0].mxu0
      %v737 = vadd.f32 0.0, %v736
      %738 = vdwg.mxu0
      %v739 = vadd.f32 %v654, %v735
      %v740 = vadd.f32 %v655, %v737
      %v741 = vld [vmem:[#allocation2 + $0x4] sm:$0xff]
      %v742 = vld [vmem:[#allocation2 + $0xc] sm:$0xf]
      %v745 = vcombine.high %v741, %v741
      %746 = vrot.lane.b32.xlu0 %v741, 127
      %v747 = vpop.permute.xlu0 %746
      %748 = vrot.lane.b32.xlu0 %v745, 127
      %v749 = vpop.permute.xlu0 %748
      %750 = vrot.lane.b32.xlu0 %v742, 127
      %v751 = vpop.permute.xlu0 %750
      %vm752 = vcmask 1039360
      %v753 = vsel %vm752, %v747, %v749
      %v754 = vsel %vm752, %v749, %v751
      %v757 = vsel %vm260, %v753, 0.0
      %v758 = vsel %vm261, %v754, 0.0
      %s759 = scalar_lea.vmem %s3, 40
      %v760 = vld [vmem:[%s759] sm:$0xff]
      %v762 = vsel %vm292, %v760, 0
      %v765 = vsel %vm296, %v757, 0
      %v768 = vsel %vm296, %v758, 0
      %770 = vmatprep.subr.mxu0 %v768
      %771 = vmatpush1.msra.mxu0 %v765
      %772 = vmatprep.subr.mxu0 0.0
      %773 = vmatpush1.msra.mxu0 0.0
      %774 = vmatprep.subr.mxu0 0.0
      %775 = vmatpush1.msra.mxu0 0.0
      %776 = vmatprep.subr.mxu0 0.0
      %777 = vmatpush1.msra.mxu0 0.0
      %778 = vmatprep.subr.mxu0 0.0
      %779 = vmatpush1.msra.mxu0 0.0
      %780 = vmatprep.subr.mxu0 0.0
      %781 = vmatpush1.msra.mxu0 0.0
      %782 = vmatprep.subr.mxu0 0.0
      %783 = vmatpush1.msra.mxu0 0.0
      %784 = vmatprep.subr.mxu0 0.0
      %785 = vmatpush1.msra.mxu0 0.0
      %786 = vmatprep.subr.mxu0 0.0
      %787 = vmatpush1.msra.mxu0 0.0
      %788 = vmatprep.subr.mxu0 0.0
      %789 = vmatpush1.msra.mxu0 0.0
      %790 = vmatprep.subr.mxu0 0.0
      %791 = vmatpush1.msra.mxu0 0.0
      %792 = vmatprep.subr.mxu0 0.0
      %793 = vmatpush1.msra.mxu0 0.0
      %794 = vmatprep.subr.mxu0 0.0
      %795 = vmatpush1.msra.mxu0 0.0
      %796 = vmatprep.subr.mxu0 0.0
      %797 = vmatpush1.msra.mxu0 0.0
      %798 = vmatprep.subr.mxu0 0.0
      %799 = vmatpush1.msra.mxu0 0.0
      %800 = vmatprep.subr.mxu0 0.0
      %801 = vmatpush1.msra.mxu0 0.0
      %802 = vmatprep.subr.mxu0 0.0
      %803 = vmatpush1.msra.mxu0 0.0
      %804 = vmatprep.subr.mxu0 0.0
      %805 = vmatpush1.msra.mxu0 0.0
      %806 = vmatprep.subr.mxu0 0.0
      %807 = vmatpush1.msra.mxu0 0.0
      %808 = vmatprep.subr.mxu0 0.0
      %809 = vmatpush1.msra.mxu0 0.0
      %810 = vmatprep.subr.mxu0 0.0
      %811 = vmatpush1.msra.mxu0 0.0
      %812 = vmatprep.subr.mxu0 0.0
      %813 = vmatpush1.msra.mxu0 0.0
      %814 = vmatprep.subr.mxu0 0.0
      %815 = vmatpush1.msra.mxu0 0.0
      %816 = vmatprep.subr.mxu0 0.0
      %817 = vmatpush1.msra.mxu0 0.0
      %818 = vmatprep.subr.mxu0 0.0
      %819 = vmatpush1.msra.mxu0 0.0
      %820 = vmatprep.subr.mxu0 0.0
      %821 = vmatpush1.msra.mxu0 0.0
      %822 = vmatprep.subr.mxu0 0.0
      %823 = vmatpush1.msra.mxu0 0.0
      %824 = vmatprep.subr.mxu0 0.0
      %825 = vmatpush1.msra.mxu0 0.0
      %826 = vmatprep.subr.mxu0 0.0
      %827 = vmatpush1.msra.mxu0 0.0
      %828 = vmatprep.subr.mxu0 0.0
      %829 = vmatpush1.msra.mxu0 0.0
      %830 = vmatprep.subr.mxu0 0.0
      %831 = vmatpush1.msra.mxu0 0.0
      %832 = vmatprep.subr.mxu0 0.0
      %833 = vmatpush1.msra.mxu0 0.0
      %834 = vmatprep.mubr.f32.mxu0 0.0
      %835 = vmatmul.mubr.f32.gmra.mrb[0].mxu0 %v762
      %v836 = vpop.f32.mrb[0].mxu0
      %v837 = vadd.f32 0.0, %v836
      %v838 = vpop.f32.mrb[0].mxu0
      %v839 = vadd.f32 0.0, %v838
      %840 = vdwg.mxu0
      %v841 = vadd.f32 %v739, %v837
      %v842 = vadd.f32 %v740, %v839
      %v843 = vld [vmem:[#allocation2 + $0x4] sm:$0xff]
      %v844 = vld [vmem:[#allocation2 + $0xc] sm:$0xf]
      %v847 = vcombine.high %v843, %v843
      %848 = vrot.lane.b32.xlu0 %v843, 113
      %v849 = vpop.permute.xlu0 %848
      %850 = vrot.lane.b32.xlu0 %v847, 113
      %v851 = vpop.permute.xlu0 %850
      %852 = vrot.lane.b32.xlu0 %v844, 113
      %v853 = vpop.permute.xlu0 %852
      %vm854 = vcmask 924672
      %v855 = vsel %vm854, %v849, %v851
      %v856 = vsel %vm854, %v851, %v853
      %v859 = vsel %vm258, %v855, 0.0
      %v860 = vsel %vm259, %v856, 0.0
      %s861 = scalar_lea.vmem %s3, 48
      %v862 = vld [vmem:[%s861] sm:$0xff]
      %v864 = vsel %vm292, %v862, 0
      %v867 = vsel %vm296, %v859, 0
      %v870 = vsel %vm296, %v860, 0
      %872 = vmatprep.subr.mxu0 %v870
      %873 = vmatpush1.msra.mxu0 %v867
      %874 = vmatprep.subr.mxu0 0.0
      %875 = vmatpush1.msra.mxu0 0.0
      %876 = vmatprep.subr.mxu0 0.0
      %877 = vmatpush1.msra.mxu0 0.0
      %878 = vmatprep.subr.mxu0 0.0
      %879 = vmatpush1.msra.mxu0 0.0
      %880 = vmatprep.subr.mxu0 0.0
      %881 = vmatpush1.msra.mxu0 0.0
      %882 = vmatprep.subr.mxu0 0.0
      %883 = vmatpush1.msra.mxu0 0.0
      %884 = vmatprep.subr.mxu0 0.0
      %885 = vmatpush1.msra.mxu0 0.0
      %886 = vmatprep.subr.mxu0 0.0
      %887 = vmatpush1.msra.mxu0 0.0
      %888 = vmatprep.subr.mxu0 0.0
      %889 = vmatpush1.msra.mxu0 0.0
      %890 = vmatprep.subr.mxu0 0.0
      %891 = vmatpush1.msra.mxu0 0.0
      %892 = vmatprep.subr.mxu0 0.0
      %893 = vmatpush1.msra.mxu0 0.0
      %894 = vmatprep.subr.mxu0 0.0
      %895 = vmatpush1.msra.mxu0 0.0
      %896 = vmatprep.subr.mxu0 0.0
      %897 = vmatpush1.msra.mxu0 0.0
      %898 = vmatprep.subr.mxu0 0.0
      %899 = vmatpush1.msra.mxu0 0.0
      %900 = vmatprep.subr.mxu0 0.0
      %901 = vmatpush1.msra.mxu0 0.0
      %902 = vmatprep.subr.mxu0 0.0
      %903 = vmatpush1.msra.mxu0 0.0
      %904 = vmatprep.subr.mxu0 0.0
      %905 = vmatpush1.msra.mxu0 0.0
      %906 = vmatprep.subr.mxu0 0.0
      %907 = vmatpush1.msra.mxu0 0.0
      %908 = vmatprep.subr.mxu0 0.0
      %909 = vmatpush1.msra.mxu0 0.0
      %910 = vmatprep.subr.mxu0 0.0
      %911 = vmatpush1.msra.mxu0 0.0
      %912 = vmatprep.subr.mxu0 0.0
      %913 = vmatpush1.msra.mxu0 0.0
      %914 = vmatprep.subr.mxu0 0.0
      %915 = vmatpush1.msra.mxu0 0.0
      %916 = vmatprep.subr.mxu0 0.0
      %917 = vmatpush1.msra.mxu0 0.0
      %918 = vmatprep.subr.mxu0 0.0
      %919 = vmatpush1.msra.mxu0 0.0
      %920 = vmatprep.subr.mxu0 0.0
      %921 = vmatpush1.msra.mxu0 0.0
      %922 = vmatprep.subr.mxu0 0.0
      %923 = vmatpush1.msra.mxu0 0.0
      %924 = vmatprep.subr.mxu0 0.0
      %925 = vmatpush1.msra.mxu0 0.0
      %926 = vmatprep.subr.mxu0 0.0
      %927 = vmatpush1.msra.mxu0 0.0
      %928 = vmatprep.subr.mxu0 0.0
      %929 = vmatpush1.msra.mxu0 0.0
      %930 = vmatprep.subr.mxu0 0.0
      %931 = vmatpush1.msra.mxu0 0.0
      %932 = vmatprep.subr.mxu0 0.0
      %933 = vmatpush1.msra.mxu0 0.0
      %934 = vmatprep.subr.mxu0 0.0
      %935 = vmatpush1.msra.mxu0 0.0
      %936 = vmatprep.mubr.f32.mxu0 0.0
      %937 = vmatmul.mubr.f32.gmra.mrb[0].mxu0 %v864
      %v938 = vpop.f32.mrb[0].mxu0
      %v939 = vadd.f32 0.0, %v938
      %v940 = vpop.f32.mrb[0].mxu0
      %v941 = vadd.f32 0.0, %v940
      %942 = vdwg.mxu0
      %v943 = vadd.f32 %v841, %v939
      %v944 = vadd.f32 %v842, %v941
      %v945 = vld [vmem:[#allocation2 + $0x4] sm:$0xff]
      %v946 = vld [vmem:[#allocation2 + $0xc] sm:$0xf]
      %s947 = scalar_lea.vmem %s3, 56
      %v948 = vld [vmem:[%s947] sm:$0xff]
      %v951 = vcombine.high %v945, %v945
      %952 = vrot.lane.b32.xlu0 %v945, 112
      %v953 = vpop.permute.xlu0 %952
      %954 = vrot.lane.b32.xlu0 %v951, 112
      %v955 = vpop.permute.xlu0 %954
      %956 = vrot.lane.b32.xlu0 %v946, 112
      %v957 = vpop.permute.xlu0 %956
      %vm958 = vcmask 916480
      %v959 = vsel %vm958, %v953, %v955
      %v960 = vsel %vm958, %v955, %v957
      %v962 = vsel %vm292, %v948, 0
      %v964 = vsel %vm296, %v959, 0
      %v966 = vsel %vm296, %v960, 0
      %968 = vmatprep.subr.mxu0 %v966
      %969 = vmatpush1.msra.mxu0 %v964
      %970 = vmatprep.subr.mxu0 0.0
      %971 = vmatpush1.msra.mxu0 0.0
      %972 = vmatprep.subr.mxu0 0.0
      %973 = vmatpush1.msra.mxu0 0.0
      %974 = vmatprep.subr.mxu0 0.0
      %975 = vmatpush1.msra.mxu0 0.0
      %976 = vmatprep.subr.mxu0 0.0
      %977 = vmatpush1.msra.mxu0 0.0
      %978 = vmatprep.subr.mxu0 0.0
      %979 = vmatpush1.msra.mxu0 0.0
      %980 = vmatprep.subr.mxu0 0.0
      %981 = vmatpush1.msra.mxu0 0.0
      %982 = vmatprep.subr.mxu0 0.0
      %983 = vmatpush1.msra.mxu0 0.0
      %984 = vmatprep.subr.mxu0 0.0
      %985 = vmatpush1.msra.mxu0 0.0
      %986 = vmatprep.subr.mxu0 0.0
      %987 = vmatpush1.msra.mxu0 0.0
      %988 = vmatprep.subr.mxu0 0.0
      %989 = vmatpush1.msra.mxu0 0.0
      %990 = vmatprep.subr.mxu0 0.0
      %991 = vmatpush1.msra.mxu0 0.0
      %992 = vmatprep.subr.mxu0 0.0
      %993 = vmatpush1.msra.mxu0 0.0
      %994 = vmatprep.subr.mxu0 0.0
      %995 = vmatpush1.msra.mxu0 0.0
      %996 = vmatprep.subr.mxu0 0.0
      %997 = vmatpush1.msra.mxu0 0.0
      %998 = vmatprep.subr.mxu0 0.0
      %999 = vmatpush1.msra.mxu0 0.0
      %1000 = vmatprep.subr.mxu0 0.0
      %1001 = vmatpush1.msra.mxu0 0.0
      %1002 = vmatprep.subr.mxu0 0.0
      %1003 = vmatpush1.msra.mxu0 0.0
      %1004 = vmatprep.subr.mxu0 0.0
      %1005 = vmatpush1.msra.mxu0 0.0
      %1006 = vmatprep.subr.mxu0 0.0
      %1007 = vmatpush1.msra.mxu0 0.0
      %1008 = vmatprep.subr.mxu0 0.0
      %1009 = vmatpush1.msra.mxu0 0.0
      %1010 = vmatprep.subr.mxu0 0.0
      %1011 = vmatpush1.msra.mxu0 0.0
      %1012 = vmatprep.subr.mxu0 0.0
      %1013 = vmatpush1.msra.mxu0 0.0
      %1014 = vmatprep.subr.mxu0 0.0
      %1015 = vmatpush1.msra.mxu0 0.0
      %1016 = vmatprep.subr.mxu0 0.0
      %1017 = vmatpush1.msra.mxu0 0.0
      %1018 = vmatprep.subr.mxu0 0.0
      %1019 = vmatpush1.msra.mxu0 0.0
      %1020 = vmatprep.subr.mxu0 0.0
      %1021 = vmatpush1.msra.mxu0 0.0
      %1022 = vmatprep.subr.mxu0 0.0
      %1023 = vmatpush1.msra.mxu0 0.0
      %1024 = vmatprep.subr.mxu0 0.0
      %1025 = vmatpush1.msra.mxu0 0.0
      %1026 = vmatprep.subr.mxu0 0.0
      %1027 = vmatpush1.msra.mxu0 0.0
      %1028 = vmatprep.subr.mxu0 0.0
      %1029 = vmatpush1.msra.mxu0 0.0
      %1030 = vmatprep.subr.mxu0 0.0
      %1031 = vmatpush1.msra.mxu0 0.0
      %1032 = vmatprep.mubr.f32.mxu0 0.0
      %1033 = vmatmul.mubr.f32.gmra.mrb[0].mxu0 %v962
      %v1034 = vpop.f32.mrb[0].mxu0
      %v1035 = vadd.f32 0.0, %v1034
      %v1036 = vpop.f32.mrb[0].mxu0
      %v1037 = vadd.f32 0.0, %v1036
      %1038 = vdwg.mxu0
      %v1039 = vadd.f32 %v943, %v1035
      %v1040 = vadd.f32 %v944, %v1037
      %v1041 = vld [vmem:[#allocation2 + $0x4] sm:$0xff]
      %v1042 = vld [vmem:[#allocation2 + $0xc] sm:$0xf]
      %v1045 = vcombine.high %v1041, %v1041
      %1046 = vrot.lane.b32.xlu0 %v1041, 111
      %v1047 = vpop.permute.xlu0 %1046
      %1048 = vrot.lane.b32.xlu0 %v1045, 111
      %v1049 = vpop.permute.xlu0 %1048
      %1050 = vrot.lane.b32.xlu0 %v1042, 111
      %v1051 = vpop.permute.xlu0 %1050
      %vm1052 = vcmask 908288
      %v1053 = vsel %vm1052, %v1047, %v1049
      %v1054 = vsel %vm1052, %v1049, %v1051
      %v1057 = vsel %vm260, %v1053, 0.0
      %v1058 = vsel %vm261, %v1054, 0.0
      %s1059 = scalar_lea.vmem %s3, 64
      %v1060 = vld [vmem:[%s1059] sm:$0xff]
      %v1062 = vsel %vm292, %v1060, 0
      %v1065 = vsel %vm296, %v1057, 0
      %v1068 = vsel %vm296, %v1058, 0
      %1070 = vmatprep.subr.mxu0 %v1068
      %1071 = vmatpush1.msra.mxu0 %v1065
      %1072 = vmatprep.subr.mxu0 0.0
      %1073 = vmatpush1.msra.mxu0 0.0
      %1074 = vmatprep.subr.mxu0 0.0
      %1075 = vmatpush1.msra.mxu0 0.0
      %1076 = vmatprep.subr.mxu0 0.0
      %1077 = vmatpush1.msra.mxu0 0.0
      %1078 = vmatprep.subr.mxu0 0.0
      %1079 = vmatpush1.msra.mxu0 0.0
      %1080 = vmatprep.subr.mxu0 0.0
      %1081 = vmatpush1.msra.mxu0 0.0
      %1082 = vmatprep.subr.mxu0 0.0
      %1083 = vmatpush1.msra.mxu0 0.0
      %1084 = vmatprep.subr.mxu0 0.0
      %1085 = vmatpush1.msra.mxu0 0.0
      %1086 = vmatprep.subr.mxu0 0.0
      %1087 = vmatpush1.msra.mxu0 0.0
      %1088 = vmatprep.subr.mxu0 0.0
      %1089 = vmatpush1.msra.mxu0 0.0
      %1090 = vmatprep.subr.mxu0 0.0
      %1091 = vmatpush1.msra.mxu0 0.0
      %1092 = vmatprep.subr.mxu0 0.0
      %1093 = vmatpush1.msra.mxu0 0.0
      %1094 = vmatprep.subr.mxu0 0.0
      %1095 = vmatpush1.msra.mxu0 0.0
      %1096 = vmatprep.subr.mxu0 0.0
      %1097 = vmatpush1.msra.mxu0 0.0
      %1098 = vmatprep.subr.mxu0 0.0
      %1099 = vmatpush1.msra.mxu0 0.0
      %1100 = vmatprep.subr.mxu0 0.0
      %1101 = vmatpush1.msra.mxu0 0.0
      %1102 = vmatprep.subr.mxu0 0.0
      %1103 = vmatpush1.msra.mxu0 0.0
      %1104 = vmatprep.subr.mxu0 0.0
      %1105 = vmatpush1.msra.mxu0 0.0
      %1106 = vmatprep.subr.mxu0 0.0
      %1107 = vmatpush1.msra.mxu0 0.0
      %1108 = vmatprep.subr.mxu0 0.0
      %1109 = vmatpush1.msra.mxu0 0.0
      %1110 = vmatprep.subr.mxu0 0.0
      %1111 = vmatpush1.msra.mxu0 0.0
      %1112 = vmatprep.subr.mxu0 0.0
      %1113 = vmatpush1.msra.mxu0 0.0
      %1114 = vmatprep.subr.mxu0 0.0
      %1115 = vmatpush1.msra.mxu0 0.0
      %1116 = vmatprep.subr.mxu0 0.0
      %1117 = vmatpush1.msra.mxu0 0.0
      %1118 = vmatprep.subr.mxu0 0.0
      %1119 = vmatpush1.msra.mxu0 0.0
      %1120 = vmatprep.subr.mxu0 0.0
      %1121 = vmatpush1.msra.mxu0 0.0
      %1122 = vmatprep.subr.mxu0 0.0
      %1123 = vmatpush1.msra.mxu0 0.0
      %1124 = vmatprep.subr.mxu0 0.0
      %1125 = vmatpush1.msra.mxu0 0.0
      %1126 = vmatprep.subr.mxu0 0.0
      %1127 = vmatpush1.msra.mxu0 0.0
      %1128 = vmatprep.subr.mxu0 0.0
      %1129 = vmatpush1.msra.mxu0 0.0
      %1130 = vmatprep.subr.mxu0 0.0
      %1131 = vmatpush1.msra.mxu0 0.0
      %1132 = vmatprep.subr.mxu0 0.0
      %1133 = vmatpush1.msra.mxu0 0.0
      %1134 = vmatprep.mubr.f32.mxu0 0.0
      %1135 = vmatmul.mubr.f32.gmra.mrb[0].mxu0 %v1062
      %v1136 = vpop.f32.mrb[0].mxu0
      %v1137 = vadd.f32 0.0, %v1136
      %v1138 = vpop.f32.mrb[0].mxu0
      %v1139 = vadd.f32 0.0, %v1138
      %1140 = vdwg.mxu0
      %v1141 = vadd.f32 %v1039, %v1137
      %v1142 = vadd.f32 %v1040, %v1139
      %1143 = vst [vmem:[%s197] sm:$0xff] %v1141
      %1144 = vst [vmem:[%s197 + $0x8] sm:$0xff] %v1142
      %v1146 = vcombine.high %v198, %v198
      %1148 = vst [vmem:[%s197 + $0x10] sm:$0xf] %v198
      %1149 = vst [vmem:[%s197 + $0x18] sm:$0xf] %v1146
      %p1150 = scmp.lt.s32.totalorder %s15, 1
      %s1151 = scalar_select %p1150, %s15, 1
      %s1152 = smul.addr %s1151, 4
      %s1153 = smul.addr %s1152, 8
      %s1154 = scalar_lea.vmem %s4, %s1153
      // Predicated region
      $region37: #{tpu_custom_call.1} parent=35 // pred_check
        %p1155 = pneg %p122
      $region38: #{tpu_custom_call.1} parent=35 // pred_check_branch
        %1157 = sbr.rel (%p1155) target = $region40
      $region39: #{tpu_custom_call.1} parent=35 // pred_region
        _
      $region40: #{tpu_custom_call.1} parent=35 // pred_fallthru
        _
    $region36: #{tpu_custom_call.1} parent=5 // pred_fallthru
      _
    %p1158 = scmp.le.s32.totalorder 2, %s10
    // Predicated region
    $region41: #{tpu_custom_call.1} parent=5 // pred_check
      %p1159 = pneg %p1158
    $region42: #{tpu_custom_call.1} parent=5 // pred_check_branch
      %1161 = sbr.rel (%p1159) target = $region44
    $region43: #{tpu_custom_call.1} parent=5 // pred_region
      %s1162 = ssub.s32 %s10, 2
      // Predicated region
      $region45: #{tpu_custom_call.1} parent=43 // pred_check
        %p1163 = pneg %p128
      $region46: #{tpu_custom_call.1} parent=43 // pred_check_branch
        %1165 = sbr.rel (%p1163) target = $region48
      $region47: #{tpu_custom_call.1} parent=43 // pred_region
        %p1166 = scmp.lt.s32.totalorder %s16, 1
        %s1167 = scalar_select %p1166, %s16, 1
        %s1168 = smul.addr %s1167, 4
        %s1169 = smul.addr %s1168, 8
        %s1170 = scalar_lea.vmem %s4, %s1169
      $region48: #{tpu_custom_call.1} parent=43 // pred_fallthru
        _
    $region44: #{tpu_custom_call.1} parent=5 // pred_fallthru
      _
  $region6: #{tpu_custom_call.1} parent=0 // loop_footer
    %s14 = sadd.s32 1, %s10
  $region7: #{tpu_custom_call.1} parent=0 // loop_footer_branch
    %9 = sbr.rel target = $region3
  $region8: #{tpu_custom_call.1} parent=0 // loop_exit
    _

</llo_original>
